<compile_context>
chip_gen: v5e
topology: v5e:2x2
jax: 0.10.0
libtpu: 0.0.40
codegen_flags: <defaults>
</compile_context>

<pallas_src>
import functools

import jax
import jax.numpy as jnp
from jax.experimental import pallas as pl
from jax.experimental.pallas import tpu as pltpu


# ---------------------------------------------------------------------------
# Kernels
# ---------------------------------------------------------------------------

def _bn_mix_affine(x, x_gn, gamma, beta, lam, *, batch, eps):
    """BatchNorm over the leading (batch) axis + sigmoid(lambda) mix + affine (f32)."""
    mean_bn = jnp.sum(x, axis=0, keepdims=True) * (1.0 / batch)            # (1, Gb, tL)
    dev = x - mean_bn
    var_bn = jnp.sum(dev * dev, axis=0, keepdims=True) * (1.0 / (batch - 1.0))
    inv_bn = pl.reciprocal(jnp.sqrt(var_bn) + eps, approx=False)
    x_bn = dev * inv_bn
    s = 1.0 / (1.0 + jnp.exp(-lam))                                        # (1, 1, 1)
    mixed = x_bn + s * (x_gn - x_bn)                                       # lerp form
    return mixed * gamma + beta


def _gn_fused_kernel(lam_ref, x_ref, gamma_ref, beta_ref, o_ref, *,
                     n_group_elems, batch, eps):
    """Single-pass path: the whole group row (full L) is resident in the block."""
    x = x_ref[...].astype(jnp.float32)                                     # (N, Gb, L)
    mean_gn = jnp.sum(x, axis=-1, keepdims=True) * (1.0 / n_group_elems)   # (N, Gb, 1)
    dev = x - mean_gn
    var_gn = jnp.sum(dev * dev, axis=-1, keepdims=True) * (1.0 / (n_group_elems - 1.0))
    inv_gn = pl.reciprocal(jnp.sqrt(var_gn) + eps, approx=False)
    x_gn = dev * inv_gn
    out = _bn_mix_affine(x, x_gn, gamma_ref[...], beta_ref[...], lam_ref[...],
                         batch=batch, eps=eps)
    o_ref[...] = out.astype(o_ref.dtype)


def _gn_stats_kernel(x_ref, mean_ref, inv_ref, *, n_group_elems, eps):
    """Pass 1: accumulate per-(n,g) sum / sum-of-squares over L tiles; finalize to
    (mean, 1/(std+eps)) on the last tile.  Outputs act as VMEM-resident accumulators."""
    lt = pl.program_id(1)
    x = x_ref[...].astype(jnp.float32)                                     # (N, Gb, tL)

    @pl.when(lt == 0)
    def _init():
        mean_ref[...] = jnp.zeros_like(mean_ref)
        inv_ref[...] = jnp.zeros_like(inv_ref)

    mean_ref[...] += jnp.sum(x, axis=-1, keepdims=True)
    inv_ref[...] += jnp.sum(x * x, axis=-1, keepdims=True)

    @pl.when(lt == pl.num_programs(1) - 1)
    def _finalize():
        s = mean_ref[...]
        sq = inv_ref[...]
        mean = s * (1.0 / n_group_elems)
        var = (sq - s * mean) * (1.0 / (n_group_elems - 1.0))   # unbiased (ddof=1)
        var = jnp.maximum(var, 0.0)
        mean_ref[...] = mean
        inv_ref[...] = pl.reciprocal(jnp.sqrt(var) + eps, approx=False)


def _gn_apply_kernel(lam_ref, x_ref, mean_ref, inv_ref, gamma_ref, beta_ref, o_ref, *,
                     batch, eps):
    """Pass 2: normalize with precomputed GN stats, BN stats in-block, mix, affine."""
    x = x_ref[...].astype(jnp.float32)                                     # (N, Gb, tL)
    x_gn = (x - mean_ref[...]) * inv_ref[...]
    out = _bn_mix_affine(x, x_gn, gamma_ref[...], beta_ref[...], lam_ref[...],
                         batch=batch, eps=eps)
    o_ref[...] = out.astype(o_ref.dtype)


# ---------------------------------------------------------------------------
# Tiling helpers + wrapper
# ---------------------------------------------------------------------------

def _pick_group_block(group_num: int) -> int:
    # Sublane-axis block size: must be a multiple of 8 or equal to the full G extent.
    if group_num % 8 == 0 and group_num > 8:
        return 8
    return group_num


def _pick_lane_tile(L: int, rows: int, elem_bytes: int, max_block_bytes: int) -> int:
    """Largest lane tile that is a multiple of 128, divides L exactly (so reductions
    never see block padding) and keeps one x block under max_block_bytes."""
    if L * rows * elem_bytes <= max_block_bytes:
        return L
    if L % 128 != 0:
        # TODO(synk): pad/mask ragged L instead of falling back to one full-L block.
        return L
    max_lanes = max(128, max_block_bytes // (rows * elem_bytes))
    n128 = L // 128
    best = 128
    for d in range(1, n128 + 1):
        if n128 % d == 0 and d * 128 <= max_lanes:
            best = d * 128
    return best


# ~512 KiB x-blocks keep double-buffered (in + out + params) plus f32 intermediates
# well inside every generation's scoped-VMEM default; the explicit 48 MiB limit just
# gives headroom (and is below v7x's 64 MiB physical VMEM).
_DEFAULT_MAX_BLOCK_BYTES = 512 * 1024
_VMEM_LIMIT_BYTES = 48 * 1024 * 1024


def gn_plus_parallel(x, gamma, beta, lambda_param, group_num, eps=1e-5,
                     max_block_bytes=_DEFAULT_MAX_BLOCK_BYTES):
    """x: (N, C, H, W) NCHW. gamma/beta: (C, 1, 1). lambda_param: (1,)."""
    N, C, H, W = x.shape
    G = group_num
    Cg = C // G
    L = Cg * H * W

    x3 = x.reshape(N, G, L)                                   # contiguous, no copy
    gamma_slab = jnp.broadcast_to(
        gamma.reshape(1, G, Cg, 1, 1).astype(jnp.float32), (1, G, Cg, H, W)).reshape(1, G, L)
    beta_slab = jnp.broadcast_to(
        beta.reshape(1, G, Cg, 1, 1).astype(jnp.float32), (1, G, Cg, H, W)).reshape(1, G, L)
    lam = lambda_param.reshape(1, 1, 1).astype(jnp.float32)

    Gb = _pick_group_block(G)
    tile_L = _pick_lane_tile(L, N * Gb, 4, max_block_bytes)
    n_gblk = G // Gb
    n_ltile = L // tile_L

    if n_ltile == 1:
        # -------- fused single pass: one HBM read of x, one write --------
        kernel = functools.partial(
            _gn_fused_kernel, n_group_elems=float(L), batch=float(N), eps=float(eps))
        out3 = pl.pallas_call(
            kernel,
            out_shape=jax.ShapeDtypeStruct((N, G, L), x.dtype),
            grid=(n_gblk,),
            in_specs=[
                pl.BlockSpec((1, 1, 1), lambda g: (0, 0, 0)),          # lambda
                pl.BlockSpec((N, Gb, L), lambda g: (0, g, 0)),         # x
                pl.BlockSpec((1, Gb, L), lambda g: (0, g, 0)),         # gamma slab
                pl.BlockSpec((1, Gb, L), lambda g: (0, g, 0)),         # beta slab
            ],
            out_specs=pl.BlockSpec((N, Gb, L), lambda g: (0, g, 0)),
            compiler_params=pltpu.CompilerParams(
                dimension_semantics=("parallel",),
                vmem_limit_bytes=_VMEM_LIMIT_BYTES),
        )(lam, x3, gamma_slab, beta_slab)
    else:
        # -------- pass 1: GroupNorm row stats (sum / sumsq -> mean, inv_std) --------
        stats_kernel = functools.partial(
            _gn_stats_kernel, n_group_elems=float(L), eps=float(eps))
        mean_gn, inv_gn = pl.pallas_call(
            stats_kernel,
            out_shape=(jax.ShapeDtypeStruct((N, G, 1), jnp.float32),
                       jax.ShapeDtypeStruct((N, G, 1), jnp.float32)),
            grid=(n_gblk, n_ltile),
            in_specs=[pl.BlockSpec((N, Gb, tile_L), lambda g, l: (0, g, l))],
            out_specs=(pl.BlockSpec((N, Gb, 1), lambda g, l: (0, g, 0)),
                       pl.BlockSpec((N, Gb, 1), lambda g, l: (0, g, 0))),
            compiler_params=pltpu.CompilerParams(
                dimension_semantics=("parallel", "arbitrary"),
                vmem_limit_bytes=_VMEM_LIMIT_BYTES),
        )(x3)

        # -------- pass 2: normalize, BN stats in-block, mix, affine --------
        apply_kernel = functools.partial(
            _gn_apply_kernel, batch=float(N), eps=float(eps))
        out3 = pl.pallas_call(
            apply_kernel,
            out_shape=jax.ShapeDtypeStruct((N, G, L), x.dtype),
            grid=(n_gblk, n_ltile),
            in_specs=[
                pl.BlockSpec((1, 1, 1), lambda g, l: (0, 0, 0)),           # lambda
                pl.BlockSpec((N, Gb, tile_L), lambda g, l: (0, g, l)),     # x
                pl.BlockSpec((N, Gb, 1), lambda g, l: (0, g, 0)),          # GN mean
                pl.BlockSpec((N, Gb, 1), lambda g, l: (0, g, 0)),          # GN 1/(std+eps)
                pl.BlockSpec((1, Gb, tile_L), lambda g, l: (0, g, l)),     # gamma slab
                pl.BlockSpec((1, Gb, tile_L), lambda g, l: (0, g, l)),     # beta slab
            ],
            out_specs=pl.BlockSpec((N, Gb, tile_L), lambda g, l: (0, g, l)),
            compiler_params=pltpu.CompilerParams(
                dimension_semantics=("parallel", "parallel"),
                vmem_limit_bytes=_VMEM_LIMIT_BYTES),
        )(lam, x3, mean_gn, inv_gn, gamma_slab, beta_slab)

    return out3.reshape(N, C, H, W)


# ---------------------------------------------------------------------------
# Pure-JAX reference (torch.std is unbiased -> ddof=1) + self-test
# ---------------------------------------------------------------------------

def gn_plus_parallel_reference(x, gamma, beta, lambda_param, group_num, eps=1e-5):
    N, C, H, W = x.shape
    xg = x.reshape(N, group_num, C // group_num, H, W)
    mean_gn = xg.mean(axis=(2, 3, 4), keepdims=True)
    std_gn = jnp.std(xg, axis=(2, 3, 4), keepdims=True, ddof=1)
    x_gn = ((xg - mean_gn) / (std_gn + eps)).reshape(N, C, H, W)
    mean_bn = x.mean(axis=0, keepdims=True)
    std_bn = jnp.std(x, axis=0, keepdims=True, ddof=1)
    x_bn = (x - mean_bn) / (std_bn + eps)
    s = jax.nn.sigmoid(lambda_param[0])
    return (s * x_gn + (1.0 - s) * x_bn) * gamma.reshape(1, C, 1, 1) + beta.reshape(1, C, 1, 1)


if __name__ == "__main__":
    key = jax.random.PRNGKey(0)
    N, C, H, W = 2, 4, 16, 16
    group_num = 2

    x = jax.random.normal(key, (N, C, H, W), dtype=jnp.float32)
    # Deterministic parameter init, exactly as in the module's __init__:
    gamma = jnp.ones((C, 1, 1), dtype=jnp.float32)
    beta = jnp.zeros((C, 1, 1), dtype=jnp.float32)
    lambda_param = jnp.ones((1,), dtype=jnp.float32)

    ref = jax.block_until_ready(
        gn_plus_parallel_reference(x, gamma, beta, lambda_param, group_num))

    # Path 1: fused single-pass kernel (whole L in one block).
    out_fused = jax.block_until_ready(
        gn_plus_parallel(x, gamma, beta, lambda_param, group_num))
    assert out_fused.shape == (N, C, H, W)
    err_fused = float(jnp.max(jnp.abs(out_fused - ref)))
    assert err_fused < 1e-4, f"fused path max abs error too large: {err_fused}"

    # Path 2: two-pass tiled kernels (stats + apply), forced with a tiny block budget.
    out_tiled = jax.block_until_ready(
        gn_plus_parallel(x, gamma, beta, lambda_param, group_num, max_block_bytes=4096))
    err_tiled = float(jnp.max(jnp.abs(out_tiled - ref)))
    assert err_tiled < 1e-4, f"tiled path max abs error too large: {err_tiled}"

    print("KERNEL_OK")
</pallas_src>

<mosaic_0001>
module attributes {stable_mosaic.version = 11 : i64} {
  func.func @_gn_fused_kernel(%arg0: i32, %arg1: memref<1x1x1xf32, #tpu.memory_space<vmem>>, %arg2: memref<2x2x512xf32, #tpu.memory_space<vmem>>, %arg3: memref<1x2x512xf32, #tpu.memory_space<vmem>>, %arg4: memref<1x2x512xf32, #tpu.memory_space<vmem>>, %arg5: memref<2x2x512xf32, #tpu.memory_space<vmem>>) attributes {dimension_semantics = [#tpu.dimension_semantics<parallel>], iteration_bounds = array<i64: 1>, scalar_prefetch = 0 : i64, scratch_operands = 0 : i64, tpu.core_type = #tpu.core_type<tc>, window_params = [{pipeline_mode = #tpu.pipeline_mode<synchronous>, transform_indices = @transform_0, window_bounds = array<i64: 1, 1, 1>}, {transform_indices = @transform_1, window_bounds = array<i64: 2, 2, 512>}, {transform_indices = @transform_2, window_bounds = array<i64: 1, 2, 512>}, {transform_indices = @transform_3, window_bounds = array<i64: 1, 2, 512>}, {transform_indices = @transform_4, window_bounds = array<i64: 2, 2, 512>}]} {
    %c0 = arith.constant 0 : index
    %c0_0 = arith.constant 0 : index
    %c0_1 = arith.constant 0 : index
    %0 = vector.load %arg2[%c0, %c0_0, %c0_1] : memref<2x2x512xf32, #tpu.memory_space<vmem>>, vector<2x2x512xf32>
    %cst = arith.constant dense<0.000000e+00> : vector<2x2xf32>
    %1 = vector.multi_reduction <add>, %0, %cst [2] : vector<2x2x512xf32> to vector<2x2xf32>
    %2 = vector.shape_cast %1 : vector<2x2xf32> to vector<2x2x1xf32>
    %cst_2 = arith.constant 0.001953125 : f32
    %3 = vector.broadcast %cst_2 : f32 to vector<2x2x1xf32>
    %4 = arith.mulf %2, %3 : vector<2x2x1xf32>
    %5 = vector.broadcast %4 : vector<2x2x1xf32> to vector<2x2x512xf32>
    %6 = arith.subf %0, %5 : vector<2x2x512xf32>
    %7 = arith.mulf %6, %6 : vector<2x2x512xf32>
    %cst_3 = arith.constant dense<0.000000e+00> : vector<2x2xf32>
    %8 = vector.multi_reduction <add>, %7, %cst_3 [2] : vector<2x2x512xf32> to vector<2x2xf32>
    %9 = vector.shape_cast %8 : vector<2x2xf32> to vector<2x2x1xf32>
    %cst_4 = arith.constant 0.00195694715 : f32
    %10 = vector.broadcast %cst_4 : f32 to vector<2x2x1xf32>
    %11 = arith.mulf %9, %10 : vector<2x2x1xf32>
    %12 = math.sqrt %11 : vector<2x2x1xf32>
    %cst_5 = arith.constant 9.99999974E-6 : f32
    %13 = vector.broadcast %cst_5 : f32 to vector<2x2x1xf32>
    %14 = arith.addf %12, %13 : vector<2x2x1xf32>
    %15 = tpu.reciprocal %14 : vector<2x2x1xf32> -> vector<2x2x1xf32>
    %16 = vector.broadcast %15 : vector<2x2x1xf32> to vector<2x2x512xf32>
    %17 = arith.mulf %6, %16 : vector<2x2x512xf32>
    %c0_6 = arith.constant 0 : index
    %c0_7 = arith.constant 0 : index
    %c0_8 = arith.constant 0 : index
    %18 = vector.load %arg3[%c0_6, %c0_7, %c0_8] : memref<1x2x512xf32, #tpu.memory_space<vmem>>, vector<1x2x512xf32>
    %c0_9 = arith.constant 0 : index
    %c0_10 = arith.constant 0 : index
    %c0_11 = arith.constant 0 : index
    %19 = vector.load %arg4[%c0_9, %c0_10, %c0_11] : memref<1x2x512xf32, #tpu.memory_space<vmem>>, vector<1x2x512xf32>
    %c0_12 = arith.constant 0 : index
    %c0_13 = arith.constant 0 : index
    %c0_14 = arith.constant 0 : index
    %20 = vector.load %arg1[%c0_12, %c0_13, %c0_14] : memref<1x1x1xf32, #tpu.memory_space<vmem>>, vector<1x1x1xf32>
    %cst_15 = arith.constant dense<0.000000e+00> : vector<2x512xf32>
    %21 = vector.multi_reduction <add>, %0, %cst_15 [0] : vector<2x2x512xf32> to vector<2x512xf32>
    %22 = vector.shape_cast %21 : vector<2x512xf32> to vector<1x2x512xf32>
    %cst_16 = arith.constant 5.000000e-01 : f32
    %23 = vector.broadcast %cst_16 : f32 to vector<1x2x512xf32>
    %24 = arith.mulf %22, %23 : vector<1x2x512xf32>
    %25 = vector.broadcast %24 : vector<1x2x512xf32> to vector<2x2x512xf32>
    %26 = arith.subf %0, %25 : vector<2x2x512xf32>
    %27 = arith.mulf %26, %26 : vector<2x2x512xf32>
    %cst_17 = arith.constant dense<0.000000e+00> : vector<2x512xf32>
    %28 = vector.multi_reduction <add>, %27, %cst_17 [0] : vector<2x2x512xf32> to vector<2x512xf32>
    %29 = vector.shape_cast %28 : vector<2x512xf32> to vector<1x2x512xf32>
    %cst_18 = arith.constant 1.000000e+00 : f32
    %30 = vector.broadcast %cst_18 : f32 to vector<1x2x512xf32>
    %31 = arith.mulf %29, %30 : vector<1x2x512xf32>
    %32 = math.sqrt %31 : vector<1x2x512xf32>
    %cst_19 = arith.constant 9.99999974E-6 : f32
    %33 = vector.broadcast %cst_19 : f32 to vector<1x2x512xf32>
    %34 = arith.addf %32, %33 : vector<1x2x512xf32>
    %35 = tpu.reciprocal %34 : vector<1x2x512xf32> -> vector<1x2x512xf32>
    %36 = vector.broadcast %35 : vector<1x2x512xf32> to vector<2x2x512xf32>
    %37 = arith.mulf %26, %36 : vector<2x2x512xf32>
    %cst_20 = arith.constant 0.000000e+00 : f32
    %38 = vector.broadcast %cst_20 : f32 to vector<1x1x1xf32>
    %39 = arith.subf %38, %20 : vector<1x1x1xf32>
    %40 = math.exp %39 : vector<1x1x1xf32>
    %cst_21 = arith.constant 1.000000e+00 : f32
    %41 = vector.broadcast %cst_21 : f32 to vector<1x1x1xf32>
    %42 = arith.addf %41, %40 : vector<1x1x1xf32>
    %cst_22 = arith.constant 1.000000e+00 : f32
    %43 = vector.broadcast %cst_22 : f32 to vector<1x1x1xf32>
    %44 = arith.divf %43, %42 : vector<1x1x1xf32>
    %45 = arith.subf %17, %37 : vector<2x2x512xf32>
    %46 = vector.broadcast %44 : vector<1x1x1xf32> to vector<2x2x512xf32>
    %47 = arith.mulf %46, %45 : vector<2x2x512xf32>
    %48 = arith.addf %37, %47 : vector<2x2x512xf32>
    %49 = vector.broadcast %18 : vector<1x2x512xf32> to vector<2x2x512xf32>
    %50 = arith.mulf %48, %49 : vector<2x2x512xf32>
    %51 = vector.broadcast %19 : vector<1x2x512xf32> to vector<2x2x512xf32>
    %52 = arith.addf %50, %51 : vector<2x2x512xf32>
    %c0_23 = arith.constant 0 : index
    %c0_24 = arith.constant 0 : index
    %c0_25 = arith.constant 0 : index
    %53 = vector.load %arg5[%c0_23, %c0_24, %c0_25] : memref<2x2x512xf32, #tpu.memory_space<vmem>>, vector<2x2x512xf32>
    tpu.vector_store %arg5[%c0_23, %c0_24, %c0_25], %52 {strides = array<i32>} : memref<2x2x512xf32, #tpu.memory_space<vmem>>, vector<2x2x512xf32>,
    return
  }
  func.func @transform_0(%arg0: i32) -> (i32, i32, i32) {
    %c0_i32 = arith.constant 0 : i32
    %c0_i32_0 = arith.constant 0 : i32
    %c0_i32_1 = arith.constant 0 : i32
    %c0_i32_2 = arith.constant 0 : i32
    return %c0_i32, %c0_i32_0, %c0_i32_1 : i32, i32, i32
  }
  func.func @transform_1(%arg0: i32) -> (i32, i32, i32) {
    %c0_i32 = arith.constant 0 : i32
    %c0_i32_0 = arith.constant 0 : i32
    %c0_i32_1 = arith.constant 0 : i32
    return %c0_i32, %arg0, %c0_i32_0 : i32, i32, i32
  }
  func.func @transform_2(%arg0: i32) -> (i32, i32, i32) {
    %c0_i32 = arith.constant 0 : i32
    %c0_i32_0 = arith.constant 0 : i32
    %c0_i32_1 = arith.constant 0 : i32
    return %c0_i32, %arg0, %c0_i32_0 : i32, i32, i32
  }
  func.func @transform_3(%arg0: i32) -> (i32, i32, i32) {
    %c0_i32 = arith.constant 0 : i32
    %c0_i32_0 = arith.constant 0 : i32
    %c0_i32_1 = arith.constant 0 : i32
    return %c0_i32, %arg0, %c0_i32_0 : i32, i32, i32
  }
  func.func @transform_4(%arg0: i32) -> (i32, i32, i32) {
    %c0_i32 = arith.constant 0 : i32
    %c0_i32_0 = arith.constant 0 : i32
    %c0_i32_1 = arith.constant 0 : i32
    return %c0_i32, %arg0, %c0_i32_0 : i32, i32, i32
  }
}

</mosaic_0001>

<llo_original>
// kernel: tpu_custom_call.1
$region0: #{tpu_custom_call.1}
  #allocation0 [shape = 'u32[]', space=smem, size = 0x4, offset = 0x4, fixed_abs, tag = 'smem constant byte address 0x4 - core index']
  #allocation1 [shape = 'u32[72,128]{1,0:T(1,128)}', space=vmem, size = 0x9000, scoped, tag = 'internal scratch']
  #allocation2 [shape = 'f32[1,1,1]{2,1,0:T(1,128)S(1)}', space=vmem, size = 0x200, scoped, tag = 'scoped memory for tpu_custom_call.1']
  %s0 = inlined_call_operand.<no memory space> [shape: f32[1,1,1], index: 0, kind: input, shape index: {}]
  %s1 = inlined_call_operand.hbm [shape: f32[2,2,512], index: 1, kind: input, shape index: {}]
  %s2 = inlined_call_operand.hbm [shape: f32[1,2,512], index: 2, kind: input, shape index: {}]
  %s3 = inlined_call_operand.hbm [shape: f32[1,2,512], index: 3, kind: input, shape index: {}]
  %s4 = inlined_call_operand.hbm [shape: f32[2,2,512], index: 4, kind: output, shape index: {}]
  %s5 = sld [smem:[#allocation0]]
  $region38: #{tpu_custom_call.1} parent=0
    _
  %s7 = ssub.s32 1, %s5
  %s8 = scalar_select 0, %s7, %s5
  %v9 = vstv %s0
  %10 = vst [vmem:[#allocation2] sm:$0x1] %v9
  $region1: #{tpu_custom_call.1} parent=0
    #allocation3 [shape = 'u8[8192]{0}', space=vmem, size = 0x2000, scoped, tag = 'input window, operand 1, single buffered']
    #allocation4 [shape = 's32[1]{0}', space=sflag, size = 0x4, scoped, tag = 'scoped memory for tpu_custom_call.1']
    #allocation5 [shape = 's32[1]{0}', space=sflag, size = 0x4, scoped, tag = 'scoped memory for tpu_custom_call.1']
    #allocation6 [shape = 'u8[4096]{0}', space=vmem, size = 0x1000, scoped, tag = 'input window, operand 2, single buffered']
    #allocation7 [shape = 's32[1]{0}', space=sflag, size = 0x4, scoped, tag = 'scoped memory for tpu_custom_call.1']
    #allocation8 [shape = 'u8[4096]{0}', space=vmem, size = 0x1000, scoped, tag = 'input window, operand 3, single buffered']
    #allocation9 [shape = 'u8[8192]{0}', space=vmem, size = 0x2000, scoped, tag = 'output window, operand 0, single buffered']
    %11 = vsyncpa [#allocation4], 0
    %12 = vsyncpa [#allocation7], 0
    %13 = vsyncpa [#allocation5], 0
    // Predicated region
    $region2: #{tpu_custom_call.1} parent=1 // pred_check
      _
    $region3: #{tpu_custom_call.1} parent=1 // pred_check_branch
      %15 = sbr.rel (0) target = $region5
    $region4: #{tpu_custom_call.1} parent=1 // pred_region
      _
    $region5: #{tpu_custom_call.1} parent=1 // pred_fallthru
      _
    // Predicated region
    $region6: #{tpu_custom_call.1} parent=1 // pred_check
      _
    $region7: #{tpu_custom_call.1} parent=1 // pred_check_branch
      %17 = sbr.rel (0) target = $region9
    $region8: #{tpu_custom_call.1} parent=1 // pred_region
      %19 = vsyncadd [#allocation4], 0
      %s20 = sshll.u32 %s1, 4
      %s21 = int_to_ptr.hbm [resolvable:$true] %s20
      %s22 = sshll.u32 [#allocation3], 4
      %s23 = int_to_ptr.vmem [resolvable:$true] %s22
      %28 = dma.hbm_to_vmem [thread:$0]  %s21, 256, %s23, [#allocation4], 128, 128, 8
    $region9: #{tpu_custom_call.1} parent=1 // pred_fallthru
      _
    // Predicated region
    $region10: #{tpu_custom_call.1} parent=1 // pred_check
      _
    $region11: #{tpu_custom_call.1} parent=1 // pred_check_branch
      %30 = sbr.rel (0) target = $region13
    $region12: #{tpu_custom_call.1} parent=1 // pred_region
      %32 = vsyncadd [#allocation7], 0
      %s34 = sshll.u32 %s2, 4
      %s35 = int_to_ptr.hbm [resolvable:$true] %s34
      %s36 = sshll.u32 [#allocation6], 4
      %s37 = int_to_ptr.vmem [resolvable:$true] %s36
      %39 = dma.hbm_to_vmem [thread:$0]  %s35, 128, %s37, [#allocation7]
    $region13: #{tpu_custom_call.1} parent=1 // pred_fallthru
      _
    // Predicated region
    $region14: #{tpu_custom_call.1} parent=1 // pred_check
      _
    $region15: #{tpu_custom_call.1} parent=1 // pred_check_branch
      %41 = sbr.rel (0) target = $region17
    $region16: #{tpu_custom_call.1} parent=1 // pred_region
      %43 = vsyncadd [#allocation7], 0
      %s45 = sshll.u32 %s3, 4
      %s46 = int_to_ptr.hbm [resolvable:$true] %s45
      %s47 = sshll.u32 [#allocation8], 4
      %s48 = int_to_ptr.vmem [resolvable:$true] %s47
      %50 = dma.hbm_to_vmem [thread:$0]  %s46, 128, %s48, [#allocation7]
    $region17: #{tpu_custom_call.1} parent=1 // pred_fallthru
      _
    // Predicated region
    $region18: #{tpu_custom_call.1} parent=1 // pred_check
      _
    $region19: #{tpu_custom_call.1} parent=1 // pred_check_branch
      %52 = sbr.rel (0) target = $region21
    $region20: #{tpu_custom_call.1} parent=1 // pred_region
      %54 = dma.done [#allocation4], 256
    $region21: #{tpu_custom_call.1} parent=1 // pred_fallthru
      _
    // Predicated region
    $region22: #{tpu_custom_call.1} parent=1 // pred_check
      _
    $region23: #{tpu_custom_call.1} parent=1 // pred_check_branch
      %56 = sbr.rel (0) target = $region25
    $region24: #{tpu_custom_call.1} parent=1 // pred_region
      %58 = dma.done [#allocation7], 128
    $region25: #{tpu_custom_call.1} parent=1 // pred_fallthru
      _
    // Predicated region
    $region26: #{tpu_custom_call.1} parent=1 // pred_check
      _
    $region27: #{tpu_custom_call.1} parent=1 // pred_check_branch
      %60 = sbr.rel (0) target = $region29
    $region28: #{tpu_custom_call.1} parent=1 // pred_region
      %62 = dma.done [#allocation7], 128
    $region29: #{tpu_custom_call.1} parent=1 // pred_fallthru
      _
    %v63 = vld [vmem:[#allocation3] sm:$0xff]
    %v64 = vld [vmem:[#allocation3 + $0x8] sm:$0xff]
    %67 = vst [vmem:[#allocation1] ss:$4 sm:$0xff] %v63
    %v68 = vld.sshfl [vmem:[#allocation1] sm:$0xff pattern:$0x73625140]
    %v69 = vld.sshfl [vmem:[#allocation1 + $0x8] sm:$0xff pattern:$0x73625140]
    %v70 = vld.sshfl [vmem:[#allocation1 + $0x10] sm:$0xff pattern:$0x73625140]
    %v71 = vld.sshfl [vmem:[#allocation1 + $0x18] sm:$0xff pattern:$0x73625140]
    %s72 = scalar_lea.vmem [#allocation1], 32
    %73 = vst [vmem:[%s72] ss:$4 sm:$0xff] %v64
    %v74 = vld.sshfl [vmem:[#allocation1 + $0x20] sm:$0xff pattern:$0x73625140]
    %v75 = vld.sshfl [vmem:[#allocation1 + $0x28] sm:$0xff pattern:$0x73625140]
    %v76 = vld.sshfl [vmem:[#allocation1 + $0x30] sm:$0xff pattern:$0x73625140]
    %v77 = vld.sshfl [vmem:[#allocation1 + $0x38] sm:$0xff pattern:$0x73625140]
    %vm86 = vcmask 1041408
    %v87 = vsel %vm86, %v68, 0.0
    %v88 = vsel %vm86, %v69, 0.0
    %v89 = vadd.f32 %v87, %v88
    %v90 = vsel %vm86, %v70, 0.0
    %v91 = vadd.f32 %v89, %v90
    %v92 = vsel %vm86, %v71, 0.0
    %v93 = vadd.f32 %v91, %v92
    %94 = vadd.xlane.f32.xlu0 %v93
    %v95 = vpop.xlane.xlu0 %94
    %v96 = vsel %vm86, %v74, 0.0
    %v97 = vsel %vm86, %v75, 0.0
    %v98 = vadd.f32 %v96, %v97
    %v99 = vsel %vm86, %v76, 0.0
    %v100 = vadd.f32 %v98, %v99
    %v101 = vsel %vm86, %v77, 0.0
    %v102 = vadd.f32 %v100, %v101
    %103 = vadd.xlane.f32.xlu0 %v102
    %v104 = vpop.xlane.xlu0 %103
    %v105 = vmul.f32 %v95, 0.001953125
    %v106 = vmul.f32 %v104, 0.001953125
    %v110 = vunpack.c.l.s4 269488144
    %v111 = vunpack.c.0.s8 %v110
    %v112 = vperm.slane %v105, %v111
    %v114 = vunpack.c.l.s4 269488144
    %v115 = vunpack.c.0.s8 %v114
    %v116 = vperm.slane %v106, %v115
    %v119 = vsub.f32 %v63, %v112
    %v120 = vsub.f32 %v64, %v116
    %v121 = vmul.f32 %v119, %v119
    %v122 = vmul.f32 %v120, %v120
    %125 = vst [vmem:[#allocation1] ss:$4 sm:$0xff] %v121
    %v126 = vld.sshfl [vmem:[#allocation1] sm:$0xff pattern:$0x73625140]
    %v127 = vld.sshfl [vmem:[#allocation1 + $0x8] sm:$0xff pattern:$0x73625140]
    %v128 = vld.sshfl [vmem:[#allocation1 + $0x10] sm:$0xff pattern:$0x73625140]
    %v129 = vld.sshfl [vmem:[#allocation1 + $0x18] sm:$0xff pattern:$0x73625140]
    %s130 = scalar_lea.vmem [#allocation1], 32
    %131 = vst [vmem:[%s130] ss:$4 sm:$0xff] %v122
    %v132 = vld.sshfl [vmem:[#allocation1 + $0x20] sm:$0xff pattern:$0x73625140]
    %v133 = vld.sshfl [vmem:[#allocation1 + $0x28] sm:$0xff pattern:$0x73625140]
    %v134 = vld.sshfl [vmem:[#allocation1 + $0x30] sm:$0xff pattern:$0x73625140]
    %v135 = vld.sshfl [vmem:[#allocation1 + $0x38] sm:$0xff pattern:$0x73625140]
    %v144 = vsel %vm86, %v126, 0.0
    %v145 = vsel %vm86, %v127, 0.0
    %v146 = vadd.f32 %v144, %v145
    %v147 = vsel %vm86, %v128, 0.0
    %v148 = vadd.f32 %v146, %v147
    %v149 = vsel %vm86, %v129, 0.0
    %v150 = vadd.f32 %v148, %v149
    %151 = vadd.xlane.f32.xlu0 %v150
    %v152 = vpop.xlane.xlu0 %151
    %v153 = vsel %vm86, %v132, 0.0
    %v154 = vsel %vm86, %v133, 0.0
    %v155 = vadd.f32 %v153, %v154
    %v156 = vsel %vm86, %v134, 0.0
    %v157 = vadd.f32 %v155, %v156
    %v158 = vsel %vm86, %v135, 0.0
    %v159 = vadd.f32 %v157, %v158
    %160 = vadd.xlane.f32.xlu0 %v159
    %v161 = vpop.xlane.xlu0 %160
    %v162 = vmul.f32 %v152, 0.0019569471
    %v163 = vmul.f32 %v161, 0.0019569471
    %v164 = vrsqrt.pop %v162
    %v165 = vmul.f32 %v164, %v162
    %v166 = vmul.f32 %v165, %v164
    %v167 = vmul.f32 0.5, %v166
    %v168 = vsub.f32 1.5, %v167
    %v169 = vmul.f32 %v164, %v168
    %v170 = vmul.f32 %v162, %v169
    %vm171 = vcmp.eq.f32.partialorder %v162, inf
    %v172 = vsel %vm171, %v162, %v170
    %vm173 = vcmp.eq.f32.partialorder %v162, 0.0
    %v174 = vand.u32 %v162, 2147483648
    %v175 = vsel %vm173, %v174, %v172
    %v176 = vrsqrt.pop %v163
    %v177 = vmul.f32 %v176, %v163
    %v178 = vmul.f32 %v177, %v176
    %v179 = vmul.f32 0.5, %v178
    %v180 = vsub.f32 1.5, %v179
    %v181 = vmul.f32 %v176, %v180
    %v182 = vmul.f32 %v163, %v181
    %vm183 = vcmp.eq.f32.partialorder %v163, inf
    %v184 = vsel %vm183, %v163, %v182
    %vm185 = vcmp.eq.f32.partialorder %v163, 0.0
    %v186 = vand.u32 %v163, 2147483648
    %v187 = vsel %vm185, %v186, %v184
    %v188 = vadd.f32 %v175, 1e-05
    %v189 = vadd.f32 %v187, 1e-05
    %v190 = vrcp.pop %v188
    %v191 = vmul.f32 %v188, %v190
    %v192 = vsub.f32 1.0, %v191
    %v193 = vmul.f32 %v190, %v192
    %v194 = vadd.f32 %v190, %v193
    %vm195 = vweird.f32 %v188
    %vm196 = vweird.f32 %v190
    %vm197 = vmor %vm195, %vm196
    %v198 = vsel %vm197, %v190, %v194
    %v199 = vand.u32 2147483647, %v188
    %vm200 = vcmp.eq.f32.partialorder %v199, 8.507059e+37
    %v201 = vand.u32 %v188, 2147483648
    %v202 = vor.u32 1.1754944e-38, %v201
    %v203 = vsel %vm200, %v202, %v198
    %v204 = vrcp.pop %v189
    %v205 = vmul.f32 %v189, %v204
    %v206 = vsub.f32 1.0, %v205
    %v207 = vmul.f32 %v204, %v206
    %v208 = vadd.f32 %v204, %v207
    %vm209 = vweird.f32 %v189
    %vm210 = vweird.f32 %v204
    %vm211 = vmor %vm209, %vm210
    %v212 = vsel %vm211, %v204, %v208
    %v213 = vand.u32 2147483647, %v189
    %vm214 = vcmp.eq.f32.partialorder %v213, 8.507059e+37
    %v215 = vand.u32 %v189, 2147483648
    %v216 = vor.u32 1.1754944e-38, %v215
    %v217 = vsel %vm214, %v216, %v212
    %v221 = vunpack.c.l.s4 269488144
    %v222 = vunpack.c.0.s8 %v221
    %v223 = vperm.slane %v203, %v222
    %v225 = vunpack.c.l.s4 269488144
    %v226 = vunpack.c.0.s8 %v225
    %v227 = vperm.slane %v217, %v226
    %v230 = vmul.f32 %v119, %v223
    %v231 = vmul.f32 %v120, %v227
    %v232 = vld [vmem:[#allocation6] sm:$0xff]
    %v233 = vld [vmem:[#allocation8] sm:$0xff]
    %v234 = vld [vmem:[#allocation2] sm:$0x1]
    %235 = vst [vmem:[#allocation1] ss:$4 sm:$0xff] %v63
    %v236 = vld.sshfl [vmem:[#allocation1] sm:$0xff pattern:$0x73625140]
    %v237 = vld.sshfl [vmem:[#allocation1 + $0x8] sm:$0xff pattern:$0x73625140]
    %v238 = vld.sshfl [vmem:[#allocation1 + $0x10] sm:$0xff pattern:$0x73625140]
    %v239 = vld.sshfl [vmem:[#allocation1 + $0x18] sm:$0xff pattern:$0x73625140]
    %s240 = scalar_lea.vmem [#allocation1], 32
    %241 = vst [vmem:[%s240] ss:$4 sm:$0xff] %v64
    %v242 = vld.sshfl [vmem:[#allocation1 + $0x20] sm:$0xff pattern:$0x73625140]
    %v243 = vld.sshfl [vmem:[#allocation1 + $0x28] sm:$0xff pattern:$0x73625140]
    %v244 = vld.sshfl [vmem:[#allocation1 + $0x30] sm:$0xff pattern:$0x73625140]
    %v245 = vld.sshfl [vmem:[#allocation1 + $0x38] sm:$0xff pattern:$0x73625140]
    %v254 = vsel %vm86, %v236, 0.0
    %v255 = vsel %vm86, %v242, 0.0
    %v256 = vadd.f32 %v254, %v255
    %v257 = vsel %vm86, %v237, 0.0
    %v258 = vsel %vm86, %v243, 0.0
    %v259 = vadd.f32 %v257, %v258
    %v260 = vsel %vm86, %v238, 0.0
    %v261 = vsel %vm86, %v244, 0.0
    %v262 = vadd.f32 %v260, %v261
    %v263 = vsel %vm86, %v239, 0.0
    %v264 = vsel %vm86, %v245, 0.0
    %v265 = vadd.f32 %v263, %v264
    %v266 = vmul.f32 %v256, 0.5
    %v267 = vmul.f32 %v259, 0.5
    %v268 = vmul.f32 %v262, 0.5
    %v269 = vmul.f32 %v265, 0.5
    %v274 = vrot.slane %v267, 6
    %v275 = vrot.slane %v268, 4
    %v276 = vrot.slane %v269, 2
    %v277 = vsel %vm86, %v266, %v274
    %vm278 = vcmask 1045508
    %v279 = vsel %vm278, %v275, %v276
    %vm280 = vcmask 1043456
    %v281 = vsel %vm280, %v277, %v279
    %v283 = vsub.f32 %v63, %v281
    %v284 = vsub.f32 %v64, %v281
    %v285 = vmul.f32 %v283, %v283
    %v286 = vmul.f32 %v284, %v284
    %289 = vst [vmem:[#allocation1] ss:$4 sm:$0xff] %v285
    %v290 = vld.sshfl [vmem:[#allocation1] sm:$0xff pattern:$0x73625140]
    %v291 = vld.sshfl [vmem:[#allocation1 + $0x8] sm:$0xff pattern:$0x73625140]
    %v292 = vld.sshfl [vmem:[#allocation1 + $0x10] sm:$0xff pattern:$0x73625140]
    %v293 = vld.sshfl [vmem:[#allocation1 + $0x18] sm:$0xff pattern:$0x73625140]
    %s294 = scalar_lea.vmem [#allocation1], 32
    %295 = vst [vmem:[%s294] ss:$4 sm:$0xff] %v286
    %v296 = vld.sshfl [vmem:[#allocation1 + $0x20] sm:$0xff pattern:$0x73625140]
    %v297 = vld.sshfl [vmem:[#allocation1 + $0x28] sm:$0xff pattern:$0x73625140]
    %v298 = vld.sshfl [vmem:[#allocation1 + $0x30] sm:$0xff pattern:$0x73625140]
    %v299 = vld.sshfl [vmem:[#allocation1 + $0x38] sm:$0xff pattern:$0x73625140]
    %v308 = vsel %vm86, %v290, 0.0
    %v309 = vsel %vm86, %v296, 0.0
    %v310 = vadd.f32 %v308, %v309
    %v311 = vsel %vm86, %v291, 0.0
    %v312 = vsel %vm86, %v297, 0.0
    %v313 = vadd.f32 %v311, %v312
    %v314 = vsel %vm86, %v292, 0.0
    %v315 = vsel %vm86, %v298, 0.0
    %v316 = vadd.f32 %v314, %v315
    %v317 = vsel %vm86, %v293, 0.0
    %v318 = vsel %vm86, %v299, 0.0
    %v319 = vadd.f32 %v317, %v318
    %v320 = vrsqrt.pop %v310
    %v321 = vmul.f32 %v320, %v310
    %v322 = vmul.f32 %v321, %v320
    %v323 = vmul.f32 0.5, %v322
    %v324 = vsub.f32 1.5, %v323
    %v325 = vmul.f32 %v320, %v324
    %v326 = vmul.f32 %v310, %v325
    %vm327 = vcmp.eq.f32.partialorder %v310, inf
    %v328 = vsel %vm327, %v310, %v326
    %vm329 = vcmp.eq.f32.partialorder %v310, 0.0
    %v330 = vand.u32 %v310, 2147483648
    %v331 = vsel %vm329, %v330, %v328
    %v332 = vrsqrt.pop %v313
    %v333 = vmul.f32 %v332, %v313
    %v334 = vmul.f32 %v333, %v332
    %v335 = vmul.f32 0.5, %v334
    %v336 = vsub.f32 1.5, %v335
    %v337 = vmul.f32 %v332, %v336
    %v338 = vmul.f32 %v313, %v337
    %vm339 = vcmp.eq.f32.partialorder %v313, inf
    %v340 = vsel %vm339, %v313, %v338
    %vm341 = vcmp.eq.f32.partialorder %v313, 0.0
    %v342 = vand.u32 %v313, 2147483648
    %v343 = vsel %vm341, %v342, %v340
    %v344 = vrsqrt.pop %v316
    %v345 = vmul.f32 %v344, %v316
    %v346 = vmul.f32 %v345, %v344
    %v347 = vmul.f32 0.5, %v346
    %v348 = vsub.f32 1.5, %v347
    %v349 = vmul.f32 %v344, %v348
    %v350 = vmul.f32 %v316, %v349
    %vm351 = vcmp.eq.f32.partialorder %v316, inf
    %v352 = vsel %vm351, %v316, %v350
    %vm353 = vcmp.eq.f32.partialorder %v316, 0.0
    %v354 = vand.u32 %v316, 2147483648
    %v355 = vsel %vm353, %v354, %v352
    %v356 = vrsqrt.pop %v319
    %v357 = vmul.f32 %v356, %v319
    %v358 = vmul.f32 %v357, %v356
    %v359 = vmul.f32 0.5, %v358
    %v360 = vsub.f32 1.5, %v359
    %v361 = vmul.f32 %v356, %v360
    %v362 = vmul.f32 %v319, %v361
    %vm363 = vcmp.eq.f32.partialorder %v319, inf
    %v364 = vsel %vm363, %v319, %v362
    %vm365 = vcmp.eq.f32.partialorder %v319, 0.0
    %v366 = vand.u32 %v319, 2147483648
    %v367 = vsel %vm365, %v366, %v364
    %v368 = vadd.f32 %v331, 1e-05
    %v369 = vadd.f32 %v343, 1e-05
    %v370 = vadd.f32 %v355, 1e-05
    %v371 = vadd.f32 %v367, 1e-05
    %v372 = vrcp.pop %v368
    %v373 = vmul.f32 %v368, %v372
    %v374 = vsub.f32 1.0, %v373
    %v375 = vmul.f32 %v372, %v374
    %v376 = vadd.f32 %v372, %v375
    %vm377 = vweird.f32 %v368
    %vm378 = vweird.f32 %v372
    %vm379 = vmor %vm377, %vm378
    %v380 = vsel %vm379, %v372, %v376
    %v381 = vand.u32 2147483647, %v368
    %vm382 = vcmp.eq.f32.partialorder %v381, 8.507059e+37
    %v383 = vand.u32 %v368, 2147483648
    %v384 = vor.u32 1.1754944e-38, %v383
    %v385 = vsel %vm382, %v384, %v380
    %v386 = vrcp.pop %v369
    %v387 = vmul.f32 %v369, %v386
    %v388 = vsub.f32 1.0, %v387
    %v389 = vmul.f32 %v386, %v388
    %v390 = vadd.f32 %v386, %v389
    %vm391 = vweird.f32 %v369
    %vm392 = vweird.f32 %v386
    %vm393 = vmor %vm391, %vm392
    %v394 = vsel %vm393, %v386, %v390
    %v395 = vand.u32 2147483647, %v369
    %vm396 = vcmp.eq.f32.partialorder %v395, 8.507059e+37
    %v397 = vand.u32 %v369, 2147483648
    %v398 = vor.u32 1.1754944e-38, %v397
    %v399 = vsel %vm396, %v398, %v394
    %v400 = vrcp.pop %v370
    %v401 = vmul.f32 %v370, %v400
    %v402 = vsub.f32 1.0, %v401
    %v403 = vmul.f32 %v400, %v402
    %v404 = vadd.f32 %v400, %v403
    %vm405 = vweird.f32 %v370
    %vm406 = vweird.f32 %v400
    %vm407 = vmor %vm405, %vm406
    %v408 = vsel %vm407, %v400, %v404
    %v409 = vand.u32 2147483647, %v370
    %vm410 = vcmp.eq.f32.partialorder %v409, 8.507059e+37
    %v411 = vand.u32 %v370, 2147483648
    %v412 = vor.u32 1.1754944e-38, %v411
    %v413 = vsel %vm410, %v412, %v408
    %v414 = vrcp.pop %v371
    %v415 = vmul.f32 %v371, %v414
    %v416 = vsub.f32 1.0, %v415
    %v417 = vmul.f32 %v414, %v416
    %v418 = vadd.f32 %v414, %v417
    %vm419 = vweird.f32 %v371
    %vm420 = vweird.f32 %v414
    %vm421 = vmor %vm419, %vm420
    %v422 = vsel %vm421, %v414, %v418
    %v423 = vand.u32 2147483647, %v371
    %vm424 = vcmp.eq.f32.partialorder %v423, 8.507059e+37
    %v425 = vand.u32 %v371, 2147483648
    %v426 = vor.u32 1.1754944e-38, %v425
    %v427 = vsel %vm424, %v426, %v422
    %v432 = vrot.slane %v399, 6
    %v433 = vrot.slane %v413, 4
    %v434 = vrot.slane %v427, 2
    %v435 = vsel %vm86, %v385, %v432
    %v436 = vsel %vm278, %v433, %v434
    %v437 = vsel %vm280, %v435, %v436
    %v439 = vmul.f32 %v283, %v437
    %v440 = vmul.f32 %v284, %v437
    %v441 = vsub.f32 0.0, %v234
    %v442 = vmul.f32 %v441, 1.442695
    %v443 = vpow.pop %v442
    %v444 = vadd.f32 %v443, 1.0
    %v445 = vrcp.pop %v444
    %v446 = vmul.f32 %v444, %v445
    %v447 = vsub.f32 1.0, %v446
    %v448 = vmul.f32 %v445, %v447
    %v449 = vadd.f32 %v445, %v448
    %vm450 = vweird.f32 %v444
    %vm451 = vweird.f32 %v445
    %vm452 = vmor %vm450, %vm451
    %v453 = vsel %vm452, %v445, %v449
    %v454 = vand.u32 2147483647, %v444
    %vm455 = vcmp.eq.f32.partialorder %v454, 8.507059e+37
    %v456 = vand.u32 %v444, 2147483648
    %v457 = vor.u32 1.1754944e-38, %v456
    %v458 = vsel %vm455, %v457, %v453
    %v459 = vmul.f32 1.0, %v458
    %v460 = vsub.f32 %v230, %v439
    %v461 = vsub.f32 %v231, %v440
    %v463 = vperm.slane %v459, 0
    %464 = vset.pattern.permute.xlu0 0
    %465 = vperm.xlu0 %464, %v463
    %v466 = vpop.permute.xlu0 %465
    %v468 = vmul.f32 %v466, %v460
    %v469 = vmul.f32 %v466, %v461
    %v470 = vadd.f32 %v439, %v468
    %v471 = vadd.f32 %v440, %v469
    %v472 = vmul.f32 %v470, %v232
    %v473 = vmul.f32 %v471, %v232
    %v474 = vadd.f32 %v472, %v233
    %v475 = vadd.f32 %v473, %v233
    %476 = vst [vmem:[#allocation9] sm:$0xff] %v474
    %477 = vst [vmem:[#allocation9 + $0x8] sm:$0xff] %v475
    // Predicated region
    $region30: #{tpu_custom_call.1} parent=1 // pred_check
      _
    $region31: #{tpu_custom_call.1} parent=1 // pred_check_branch
      %479 = sbr.rel (0) target = $region33
    $region32: #{tpu_custom_call.1} parent=1 // pred_region
      %481 = vsyncadd [#allocation5], 0
      %s482 = sshll.u32 [#allocation9], 4
      %s483 = int_to_ptr.vmem [resolvable:$true] %s482
      %s484 = sshll.u32 %s4, 4
      %s485 = int_to_ptr.hbm [resolvable:$true] %s484
      %490 = dma.vmem_to_hbm [thread:$0]  %s483, 256, %s485, [#allocation5], 128, 128, 8
    $region33: #{tpu_custom_call.1} parent=1 // pred_fallthru
      _
    // Predicated region
    $region34: #{tpu_custom_call.1} parent=1 // pred_check
      _
    $region35: #{tpu_custom_call.1} parent=1 // pred_check_branch
      %492 = sbr.rel (0) target = $region37
    $region36: #{tpu_custom_call.1} parent=1 // pred_region
      %494 = dma.done [#allocation5], 256
    $region37: #{tpu_custom_call.1} parent=1 // pred_fallthru
      _
    %495 = vsyncpa [#allocation4], 1
    %496 = vsyncpa [#allocation7], 1
    %497 = vsyncpa [#allocation5], 1

</llo_original>
